<compile_context>
chip_gen: v7x
topology: tpu7x:2x2x1
jax: 0.10.0
libtpu: 0.0.40
codegen_flags: <defaults>
</compile_context>

<pallas_src>
import jax
import jax.numpy as jnp
from jax.experimental import pallas as pl
from jax.experimental.pallas import tpu as pltpu


def _embedding_gather_kernel(idx_ref, w_hbm, out_ref, copy_sem):
    # idx_ref : (n_total,) int32 in SMEM (scalar prefetch) -- all token ids
    # w_hbm   : (V, E_pad)  in HBM (pl.ANY)                -- full table
    # out_ref : (TN, E_pad) in VMEM                        -- this tile's rows
    # copy_sem: scalar DMA semaphore shared by all row copies of this tile
    tn = out_ref.shape[0]
    base = pl.program_id(0) * tn

    def _row_copy(t):
        row = idx_ref[base + t]
        return pltpu.make_async_copy(
            w_hbm.at[pl.ds(row, 1), :],
            out_ref.at[pl.ds(t, 1), :],
            copy_sem,
        )

    # Issue all row gathers for this tile, then drain them.  Every copy has
    # identical size, so per-descriptor waits on the shared semaphore are
    # exact regardless of completion order.
    @pl.loop(0, tn)
    def _start(t):
        _row_copy(t).start()

    @pl.loop(0, tn)
    def _wait(t):
        _row_copy(t).wait()


def embedding_forward(ix, weight, *, token_tile=128):
    """ix: (B, T) integer indices, weight: (V, E) float -> (B, T, E)."""
    B, T = ix.shape
    V, E = weight.shape
    N = B * T

    # Lane-dense embedding dim (multiple of 128).  For realistic tables this
    # padding should be done once at init time, not per call.
    e_pad = ((E + 127) // 128) * 128
    if e_pad != E:
        weight = jnp.pad(weight, ((0, 0), (0, e_pad - E)))

    # Flatten tokens; clamp (vs. PyTorch's raise) and pad to a tile multiple.
    idx_flat = jnp.clip(ix.reshape(N).astype(jnp.int32), 0, V - 1)
    n_pad = (-N) % token_tile
    if n_pad:
        idx_flat = jnp.concatenate([idx_flat, jnp.zeros((n_pad,), jnp.int32)])
    n_total = N + n_pad
    n_tiles = n_total // token_tile

    # VMEM needed: just the double-buffered output tile (+ headroom); the
    # table never enters VMEM.
    out_tile_bytes = token_tile * e_pad * weight.dtype.itemsize
    vmem_limit = int(min(96 * 1024 * 1024,
                         max(16 * 1024 * 1024, 8 * out_tile_bytes)))

    out = pl.pallas_call(
        _embedding_gather_kernel,
        out_shape=jax.ShapeDtypeStruct((n_total, e_pad), weight.dtype),
        grid_spec=pltpu.PrefetchScalarGridSpec(
            num_scalar_prefetch=1,
            grid=(n_tiles,),
            in_specs=[
                # Full table stays in HBM; rows are gathered by manual DMA.
                pl.BlockSpec(memory_space=pl.ANY),
            ],
            out_specs=pl.BlockSpec((token_tile, e_pad),
                                   lambda i, idx_ref: (i, 0)),
            scratch_shapes=[pltpu.SemaphoreType.DMA(())],
        ),
        compiler_params=pltpu.CompilerParams(
            dimension_semantics=("parallel",),
            vmem_limit_bytes=vmem_limit,
        ),
    )(idx_flat, weight)

    return out[:N, :E].reshape(B, T, E)


if __name__ == "__main__":
    key = jax.random.PRNGKey(0)
    k_w, k_ix = jax.random.split(key)

    num_embeddings = 16   # V
    embedding_dim = 32    # E
    B, T = 2, 8

    # Deterministic "randn" weight, matching nn.Parameter(torch.randn((V, E)))
    weight = jax.random.normal(k_w, (num_embeddings, embedding_dim), jnp.float32)
    ix = jax.random.randint(k_ix, (B, T), 0, num_embeddings, jnp.int32)

    out = embedding_forward(ix, weight)
    out = jax.block_until_ready(out)

    # Reference check: plain JAX gather (same semantics as weight[IX.long()])
    ref = weight[ix]
    assert out.shape == (B, T, embedding_dim)
    assert jnp.allclose(out, ref, atol=1e-6), "mismatch vs reference gather"

    print("KERNEL_OK")
</pallas_src>

<mosaic_0001>
module attributes {stable_mosaic.version = 11 : i64} {
  func.func @_embedding_gather_kernel(%arg0: i32, %arg1: memref<128xi32, #tpu.memory_space<smem>>, %arg2: memref<16x128xf32, #tpu.memory_space<any>>, %arg3: memref<128x128xf32, #tpu.memory_space<vmem>>, %arg4: memref<!tpu.dma_semaphore, #tpu.memory_space<semaphore_mem>>) attributes {dimension_semantics = [#tpu.dimension_semantics<parallel>], iteration_bounds = array<i64: 1>, scalar_prefetch = 1 : i64, scratch_operands = 1 : i64, tpu.core_type = #tpu.core_type<tc>, window_params = [{}, {transform_indices = @transform_1, window_bounds = array<i64: 128, 128>}]} {
    %c128_i32 = arith.constant 128 : i32
    %0 = arith.muli %arg0, %c128_i32 : i32
    %c0_i32 = arith.constant 0 : i32
    %c128_i32_0 = arith.constant 128 : i32
    %1 = arith.addi %c0_i32, %c128_i32_0 : i32
    %c1_i32 = arith.constant 1 : i32
    scf.for %arg5 = %c0_i32 to %1 step %c1_i32  : i32 {
      %c1_i32_6 = arith.constant 1 : i32
      %3 = arith.muli %arg5, %c1_i32_6 : i32
      %c0_i32_7 = arith.constant 0 : i32
      %4 = arith.addi %c0_i32_7, %3 : i32
      %5 = arith.addi %0, %4 : i32
      %6 = arith.index_cast %5 : i32 to index
      %7 = memref.load %arg1[%6] : memref<128xi32, #tpu.memory_space<smem>>
      %c0_i32_8 = arith.constant 0 : i32
      %8 = tpu.memref_slice %arg2[%7, %c0_i32_8] : memref<16x128xf32, #tpu.memory_space<any>> -> memref<1x128xf32, #tpu.memory_space<any>>
      %c0_i32_9 = arith.constant 0 : i32
      %9 = tpu.memref_slice %arg3[%4, %c0_i32_9] : memref<128x128xf32, #tpu.memory_space<vmem>> -> memref<1x128xf32, #tpu.memory_space<vmem>>
      tpu.enqueue_dma source(%8 : memref<1x128xf32, #tpu.memory_space<any>>) target(%9 : memref<1x128xf32, #tpu.memory_space<vmem>>) target_semaphore(%arg4 : memref<!tpu.dma_semaphore, #tpu.memory_space<semaphore_mem>>)
    }
    %c128_i32_1 = arith.constant 128 : i32
    %c0_i32_2 = arith.constant 0 : i32
    %c128_i32_3 = arith.constant 128 : i32
    %2 = arith.addi %c0_i32_2, %c128_i32_3 : i32
    %c1_i32_4 = arith.constant 1 : i32
    scf.for %arg5 = %c0_i32_2 to %2 step %c1_i32_4  : i32 {
      %c1_i32_6 = arith.constant 1 : i32
      %3 = arith.muli %arg5, %c1_i32_6 : i32
      %c0_i32_7 = arith.constant 0 : i32
      %4 = arith.addi %c0_i32_7, %3 : i32
      %5 = arith.addi %0, %4 : i32
      %6 = arith.index_cast %5 : i32 to index
      %7 = memref.load %arg1[%6] : memref<128xi32, #tpu.memory_space<smem>>
      %c0_i32_8 = arith.constant 0 : i32
      %8 = tpu.memref_slice %arg2[%7, %c0_i32_8] : memref<16x128xf32, #tpu.memory_space<any>> -> memref<1x128xf32, #tpu.memory_space<any>>
      %c0_i32_9 = arith.constant 0 : i32
      %9 = tpu.memref_slice %arg3[%4, %c0_i32_9] : memref<128x128xf32, #tpu.memory_space<vmem>> -> memref<1x128xf32, #tpu.memory_space<vmem>>
      tpu.wait_dma2 semaphore(%arg4 : memref<!tpu.dma_semaphore, #tpu.memory_space<semaphore_mem>>) src(%8 : memref<1x128xf32, #tpu.memory_space<any>>) dst(%9 : memref<1x128xf32, #tpu.memory_space<vmem>>)
    }
    %c128_i32_5 = arith.constant 128 : i32
    return
  }
  func.func @transform_1(%arg0: i32, %arg1: memref<128xi32, #tpu.memory_space<smem>>) -> (i32, i32) {
    %c0_i32 = arith.constant 0 : i32
    %c0_i32_0 = arith.constant 0 : i32
    return %arg0, %c0_i32 : i32, i32
  }
}

</mosaic_0001>

<llo_original>
// kernel: tpu_custom_call.1
$region0: #{tpu_custom_call.1}
  #allocation0 [shape = 'u32[]', space=smem, size = 0x4, offset = 0x4, fixed_abs, tag = 'smem constant byte address 0x4 - core index']
  #allocation1 [shape = 'u32[144,128]{1,0:T(1,128)}', space=vmem, size = 0x12000, scoped, tag = 'internal scratch']
  #allocation2 [shape = 's32[1]{0}', space=sflag, size = 0x4, scoped, tag = 'scratch operand']
  #allocation3 [shape = 's32[1]{0}', space=sflag, size = 0x4, scoped, tag = 'scoped memory for tpu_custom_call.1']
  #allocation4 [shape = 'u8[512]{0}', space=smem, size = 0x200, scoped, tag = 'prefetched SMEM operand 0']
  #allocation7 [shape = 's32[]', space=sflag, size = 0x4, offset = 0, fixed_abs, tag = 'sflag constant byte address 0x0 - dummy sync flag']
  #allocation8 [shape = 's32[]', space=sflag, size = 0x4, offset = 0, fixed_abs, tag = 'sflag constant byte address 0x0 - dummy sync flag']
  #allocation9 [shape = 'u32[]', space=smem, size = 0x4, offset = 0x44, fixed_abs, tag = 'smem constant byte address 0x44 - assertion arg 0']
  #allocation10 [shape = 'u32[]', space=smem, size = 0x4, offset = 0x48, fixed_abs, tag = 'smem constant byte address 0x48 - assertion arg 1']
  %s0 = inlined_call_operand.hbm [shape: s32[128], index: 0, kind: input, shape index: {}]
  %s1 = inlined_call_operand.hbm [shape: f32[16,128], index: 1, kind: input, shape index: {}]
  %s2 = inlined_call_operand.hbm [shape: f32[128,128], index: 2, kind: output, shape index: {}]
  %s3 = sld [smem:[#allocation0]]
  $region28: #{tpu_custom_call.1} parent=0
    _
  %s5 = ssub.s32 1, %s3
  %s6 = scalar_select 0, %s5, %s3
  %8 = dma.hbm_to_smem %s0, 16, [#allocation4], [#allocation3]
  %9 = dma.done [#allocation3], 16
  %10 = sfence
  $region1: #{tpu_custom_call.1} parent=0
    #allocation5 [shape = 'u8[65536]{0}', space=vmem, size = 0x10000, scoped, tag = 'output window, operand 0, single buffered']
    #allocation6 [shape = 's32[1]{0}', space=sflag, size = 0x4, scoped, tag = 'scoped memory for tpu_custom_call.1']
    %11 = vsyncpa [#allocation6], 0
    %s12 = smul.u32 0, 128
    loop: start=0, step=1, limit=128
    $region2: #{tpu_custom_call.1} parent=1 // loop_pre_header
      _
    $region3: #{tpu_custom_call.1} parent=1 // loop_header
      %s14 = sphi 0, %s18
      %p15 = scmp.ge.s32.totalorder %s14, 128
    $region4: #{tpu_custom_call.1} parent=1 // loop_header_branch
      %17 = sbr.rel (%p15) target = $region8
    $region5: #{tpu_custom_call.1} parent=1 // loop_body
      %s19 = sadd.s32 %s12, %s14
      %s20 = sld [smem:[#allocation4 + %s19]]
      %s21 = smul.addr %s20, 16
      %s22 = scalar_lea.hbm %s1, %s21
      %s23 = scalar_lea.vmem [#allocation5], %s14
      // Predicated region
      $region9: #{tpu_custom_call.1} parent=5 // pred_check
        _
      $region10: #{tpu_custom_call.1} parent=5 // pred_check_branch
        %25 = sbr.rel target = $region12
      $region11: #{tpu_custom_call.1} parent=5 // pred_region
        %26 = sst [smem:[#allocation9]] [#allocation8]
        %27 = sst [smem:[#allocation10]] [#allocation7]
      $region12: #{tpu_custom_call.1} parent=5 // pred_fallthru
        _
      %29 = shalt.err (0)
      %s31 = sshll.u32 %s23, 4
      %s32 = int_to_ptr.vmem [resolvable:$true] %s31
      %34 = dma.hbm_to_vmem [thread:$0]  %s22, 16, %s32, [#allocation2]
    $region6: #{tpu_custom_call.1} parent=1 // loop_footer
      %s18 = sadd.s32 1, %s14
    $region7: #{tpu_custom_call.1} parent=1 // loop_footer_branch
      %13 = sbr.rel target = $region3
    $region8: #{tpu_custom_call.1} parent=1 // loop_exit
      _
    loop: start=0, step=1, limit=128
    $region13: #{tpu_custom_call.1} parent=1 // loop_pre_header
      _
    $region14: #{tpu_custom_call.1} parent=1 // loop_header
      %s36 = sphi 0, %s40
      %p37 = scmp.ge.s32.totalorder %s36, 128
    $region15: #{tpu_custom_call.1} parent=1 // loop_header_branch
      %39 = sbr.rel (%p37) target = $region19
    $region16: #{tpu_custom_call.1} parent=1 // loop_body
      %s41 = sadd.s32 %s12, %s36
      %s42 = sld [smem:[#allocation4 + %s41]]
      %s43 = smul.u32 1, 1
      %s44 = sshll.u32 %s43, 4
      %45 = dma.done [#allocation2], %s44
    $region17: #{tpu_custom_call.1} parent=1 // loop_footer
      %s40 = sadd.s32 1, %s36
    $region18: #{tpu_custom_call.1} parent=1 // loop_footer_branch
      %35 = sbr.rel target = $region14
    $region19: #{tpu_custom_call.1} parent=1 // loop_exit
      _
    // Predicated region
    $region20: #{tpu_custom_call.1} parent=1 // pred_check
      _
    $region21: #{tpu_custom_call.1} parent=1 // pred_check_branch
      %47 = sbr.rel (0) target = $region23
    $region22: #{tpu_custom_call.1} parent=1 // pred_region
      %s49 = ssub.s32 2048, 2048
      %50 = vsyncadd [#allocation6], %s49
      %s51 = sshll.u32 [#allocation5], 4
      %s52 = int_to_ptr.vmem [resolvable:$true] %s51
      %57 = dma.vmem_to_hbm [thread:$0]  %s52, 2048, %s2, [#allocation6], 128, 128, 8
    $region23: #{tpu_custom_call.1} parent=1 // pred_fallthru
      _
    // Predicated region
    $region24: #{tpu_custom_call.1} parent=1 // pred_check
      _
    $region25: #{tpu_custom_call.1} parent=1 // pred_check_branch
      %59 = sbr.rel (0) target = $region27
    $region26: #{tpu_custom_call.1} parent=1 // pred_region
      %60 = dma.done [#allocation6], 2048
    $region27: #{tpu_custom_call.1} parent=1 // pred_fallthru
      _
    %61 = vsyncpa [#allocation6], 1
  %62 = vsyncmov [#allocation2]
  %s63 = vpop.sfrf %62
  %p64 = scmp.eq.s32.totalorder %s63, 0
  %p65 = pneg %p64
  %67 = shalt.err (%p65)

</llo_original>
